<compile_context>
chip_gen: v7x
topology: tpu7x:2x2x1
jax: 0.10.0
libtpu: 0.0.40
codegen_flags: <defaults>
</compile_context>

<pallas_src>
import math
from functools import partial

import jax
import jax.numpy as jnp
from jax import lax
from jax.experimental import pallas as pl
from jax.experimental.pallas import tpu as pltpu

LN_EPS = 1e-5
_MIB = 1024 * 1024
_TILE_CANDIDATES = (512, 256, 128, 64, 32, 16, 8)


# --------------------------------------------------------------------------- hardware helpers
def _vmem_budget_bytes():
    """Per-generation VMEM budget: ~96 MiB on 128 MiB parts (v5e/v6e), ~48 MiB on v7x."""
    try:
        cap = int(pltpu.get_tpu_info().vmem_capacity_bytes)
        return int(min(cap * 3 // 4, 96 * _MIB))
    except Exception:
        return 48 * _MIB  # conservative: fits every generation's physical VMEM


_WEIGHT_PIPE = "unprobed"


def _weight_pipeline_mode():
    """pl.Buffered(1) for grid-invariant weight blocks (halves their VMEM) when supported."""
    global _WEIGHT_PIPE
    if _WEIGHT_PIPE == "unprobed":
        try:
            def _probe_kernel(w_ref, o_ref):
                o_ref[...] = w_ref[...] + 1.0

            probe = pl.pallas_call(
                _probe_kernel,
                out_shape=jax.ShapeDtypeStruct((8, 128), jnp.float32),
                grid=(2,),
                in_specs=[pl.BlockSpec((8, 128), lambda i: (0, 0),
                                       pipeline_mode=pl.Buffered(1))],
                out_specs=pl.BlockSpec((8, 128), lambda i: (0, 0)),
            )
            jax.block_until_ready(probe(jnp.zeros((8, 128), jnp.float32)))
            _WEIGHT_PIPE = pl.Buffered(1)
        except Exception:
            _WEIGHT_PIPE = None
    return _WEIGHT_PIPE


def _const_spec(shape):
    """BlockSpec for a grid-invariant operand (weights/biases/LN), single-buffered if possible."""
    idx = lambda *_: (0,) * len(shape)
    pm = _weight_pipeline_mode()
    if pm is None:
        return pl.BlockSpec(shape, idx)
    return pl.BlockSpec(shape, idx, pipeline_mode=pm)


def _row_tile(n_rows, weight_bytes, per_row_bytes, budget):
    fitting = [t for t in _TILE_CANDIDATES
               if n_rows % t == 0 and weight_bytes + t * per_row_bytes <= budget]
    if fitting:
        return fitting[0]
    dividing = [t for t in _TILE_CANDIDATES if n_rows % t == 0]
    return dividing[-1] if dividing else n_rows


def _q_tile(seq_len, e, itemsize, budget, with_weights):
    def need(t):
        b = 4 * seq_len * e * itemsize                       # K + V blocks (double-buffered)
        b += e * e * itemsize + 4 * t * e * (4 + itemsize)   # Wo^T + q / residual-x tiles
        b += 3 * t * e * 4                                   # ctx scratch + output tile
        b += (1 + (3 if with_weights else 0)) * t * seq_len * 4   # scores (+ wsum & attn out)
        return b
    fitting = [t for t in _TILE_CANDIDATES if seq_len % t == 0 and need(t) <= budget]
    if fitting:
        return fitting[0]
    dividing = [t for t in _TILE_CANDIDATES if seq_len % t == 0]
    return dividing[-1] if dividing else seq_len


# --------------------------------------------------------------------------- in-kernel math
def _layer_norm(x, gamma, beta):
    mu = jnp.mean(x, axis=-1, keepdims=True)
    xc = x - mu
    var = jnp.mean(xc * xc, axis=-1, keepdims=True)
    return xc * lax.rsqrt(var + LN_EPS) * gamma + beta


def _recip(x):
    # EUP reciprocal + one Newton step: keeps the divide off the VALU path, f32-accurate.
    r = pl.reciprocal(x, approx=True)
    return r * (2.0 - x * r)


def _erf(x):
    # Abramowitz & Stegun 7.1.26 (|err| <= 1.5e-7): exact-GELU semantics; the 1/(1+p|x|)
    # divide over the (rows, H) hidden tensor goes through the EUP, not the VALU.
    p = 0.3275911
    a1, a2, a3, a4, a5 = 0.254829592, -0.284496736, 1.421413741, -1.453152027, 1.061405429
    ax = jnp.abs(x)
    t = _recip(1.0 + p * ax)
    poly = ((((a5 * t + a4) * t + a3) * t + a2) * t + a1) * t
    y = 1.0 - poly * jnp.exp(-ax * ax)
    return jnp.where(x >= 0, y, -y)


def _gelu_exact(x):
    # nn.GELU() default (erf-exact)
    return 0.5 * x * (1.0 + _erf(x * 0.7071067811865476))


# --------------------------------------------------------------------------- one-time weight prep
def prepare_encoder_params(layers, num_heads, compute_dtype=jnp.bfloat16):
    """One-time preparation (hoisted out of the forward pass): pre-transpose / pre-stack the
    projections, fold the 1/sqrt(Dh) softmax scale into W_q / b_q, cast matmul operands to the
    MXU compute dtype, and reshape biases / LN params to (1, .) rows."""
    prepared = []
    for lp in layers:
        E = lp["w_o"].shape[0]
        H = lp["w1"].shape[0]
        Dh = E // num_heads
        scale = 1.0 / math.sqrt(Dh)
        w_in = lp["w_in"].astype(jnp.float32)
        b_in = lp["b_in"].astype(jnp.float32)
        col_scale = jnp.concatenate([jnp.full((E,), scale, jnp.float32),
                                     jnp.ones((2 * E,), jnp.float32)])
        prepared.append(dict(
            ln1_g=lp["ln1_g"].reshape(1, E).astype(jnp.float32),
            ln1_b=lp["ln1_b"].reshape(1, E).astype(jnp.float32),
            w_qkv_t=(w_in * col_scale[:, None]).T.astype(compute_dtype),   # (E, 3E), q pre-scaled
            b_qkv=(b_in * col_scale).reshape(1, 3 * E),                     # (1, 3E) f32
            w_o_t=lp["w_o"].T.astype(compute_dtype),                        # (E, E)
            b_o=lp["b_o"].reshape(1, E).astype(jnp.float32),
            ln2_g=lp["ln2_g"].reshape(1, E).astype(jnp.float32),
            ln2_b=lp["ln2_b"].reshape(1, E).astype(jnp.float32),
            w1_t=lp["w1"].T.astype(compute_dtype),                          # (E, H)
            b1=lp["b1"].reshape(1, H).astype(jnp.float32),
            w2_t=lp["w2"].T.astype(compute_dtype),                          # (H, E)
            b2=lp["b2"].reshape(1, E).astype(jnp.float32),
        ))
    return jax.block_until_ready(prepared)


# --------------------------------------------------------------------------- QKV projection kernel
def qkv_proj_kernel(x_ref, g_ref, b_ref, w_t_ref, bias_ref, q_ref, k_ref, v_ref,
                    *, compute_dtype):
    x = x_ref[...].astype(jnp.float32)                       # (Tr, E)
    xn = _layer_norm(x, g_ref[...], b_ref[...])              # PreNorm (LN1)
    # Fused QKV projection: one full-width MXU matmul + a single hoisted bias add.
    qkv = jnp.dot(xn.astype(compute_dtype), w_t_ref[...],
                  preferred_element_type=jnp.float32) + bias_ref[...]      # (Tr, 3E)
    E = q_ref.shape[-1]
    q_ref[...] = qkv[:, :E].astype(q_ref.dtype)              # q already carries 1/sqrt(Dh)
    k_ref[...] = qkv[:, E:2 * E].astype(k_ref.dtype)
    v_ref[...] = qkv[:, 2 * E:].astype(v_ref.dtype)


def qkv_projection(x, p):
    B, L, E = x.shape
    N = B * L
    compute_dtype = p["w_qkv_t"].dtype
    isz = jnp.dtype(compute_dtype).itemsize
    budget = _vmem_budget_bytes()
    Tr = _row_tile(N, weight_bytes=E * 3 * E * isz,
                   per_row_bytes=4 * E * 4 + 6 * E * isz + 3 * E * 4, budget=budget)
    x2d = x.reshape(N, E)

    kernel = partial(qkv_proj_kernel, compute_dtype=compute_dtype)
    flops = 2 * N * E * 3 * E + 8 * N * E
    bytes_acc = N * E * x.dtype.itemsize + E * 3 * E * isz + 3 * N * E * isz
    q, k, v = pl.pallas_call(
        kernel,
        out_shape=tuple(jax.ShapeDtypeStruct((N, E), compute_dtype) for _ in range(3)),
        grid_spec=pltpu.PrefetchScalarGridSpec(
            num_scalar_prefetch=0,
            grid=(N // Tr,),
            in_specs=[
                pl.BlockSpec((Tr, E), lambda i: (i, 0)),      # x rows
                _const_spec((1, E)),                          # LN1 gamma
                _const_spec((1, E)),                          # LN1 beta
                _const_spec((E, 3 * E)),                      # W_in^T (q pre-scaled)
                _const_spec((1, 3 * E)),                      # b_in  (q pre-scaled)
            ],
            out_specs=tuple(pl.BlockSpec((Tr, E), lambda i: (i, 0)) for _ in range(3)),
        ),
        compiler_params=pltpu.CompilerParams(
            dimension_semantics=("parallel",), vmem_limit_bytes=budget),
        cost_estimate=pl.CostEstimate(flops=int(flops), transcendentals=int(2 * N),
                                      bytes_accessed=int(bytes_acc)),
    )(x2d, p["ln1_g"], p["ln1_b"], p["w_qkv_t"], p["b_qkv"])
    return q.reshape(B, L, E), k.reshape(B, L, E), v.reshape(B, L, E)


# --------------------------------------------------------------------------- attention core kernel
def attn_core_kernel(x_ref, q_ref, k_ref, v_ref, wo_t_ref, bo_ref, *rest,
                     num_heads, compute_dtype, with_weights):
    if with_weights:
        out_ref, attn_ref, ctx_ref, wsum_ref = rest
    else:
        out_ref, ctx_ref = rest
        attn_ref = wsum_ref = None

    x = x_ref[0].astype(jnp.float32)                          # (Tq, E) residual rows
    q = q_ref[0]                                              # (Tq, E) pre-scaled queries
    k = k_ref[0]                                              # (L, E)
    v = v_ref[0]                                              # (L, E)
    E = x.shape[-1]
    Dh = E // num_heads

    if with_weights:
        wsum_ref[...] = jnp.zeros_like(wsum_ref)

    # TODO(synk): when Dh is not a multiple of 128 the per-head column slices / ctx stores are
    # lane-misaligned (masked vst); pad Dh or lay ctx head-major if the bundle shows it matters.
    # TODO(synk): for extreme L, add a kv grid axis with online softmax; full-K per q-tile is
    # kept here because (L, E) K/V blocks fit the per-generation VMEM budget.
    for h in range(num_heads):
        lo = h * Dh
        q_h = q[:, lo:lo + Dh].astype(compute_dtype)
        k_h = k[:, lo:lo + Dh].astype(compute_dtype)
        v_h = v[:, lo:lo + Dh].astype(compute_dtype)
        # q_h @ k_h^T without an explicit transpose; 1/sqrt(Dh) already folded into W_q.
        s = lax.dot_general(q_h, k_h, (((1,), (1,)), ((), ())),
                            preferred_element_type=jnp.float32)            # (Tq, L)
        s = s - jnp.max(s, axis=-1, keepdims=True)
        p = jnp.exp(s)
        p = p * _recip(jnp.sum(p, axis=-1, keepdims=True))   # EUP softmax denominator
        if with_weights:
            wsum_ref[...] += p
        ctx_ref[:, lo:lo + Dh] = jnp.dot(p.astype(compute_dtype), v_h,
                                         preferred_element_type=jnp.float32)

    # Single full-width output projection + residual with the un-normed input rows.
    attn_out = jnp.dot(ctx_ref[...].astype(compute_dtype), wo_t_ref[...],
                       preferred_element_type=jnp.float32) + bo_ref[...]    # (Tq, E)
    out_ref[0] = (x + attn_out).astype(out_ref.dtype)
    if with_weights:
        attn_ref[0] = (wsum_ref[...] * (1.0 / num_heads)).astype(attn_ref.dtype)


def attention_core(x, q, k, v, p, num_heads, return_attn_weights=True,
                   attn_weights_dtype=jnp.float32):
    """y = x + out_proj(MHA(q, k, v)); optionally returns head-averaged attention weights."""
    B, L, E = x.shape
    compute_dtype = p["w_o_t"].dtype
    isz = jnp.dtype(compute_dtype).itemsize
    budget = _vmem_budget_bytes()
    Tq = _q_tile(L, E, isz, budget, return_attn_weights)
    nq = L // Tq

    kernel = partial(attn_core_kernel, num_heads=num_heads,
                     compute_dtype=compute_dtype, with_weights=return_attn_weights)
    in_specs = [
        pl.BlockSpec((1, Tq, E), lambda b, i: (b, i, 0)),     # residual x rows
        pl.BlockSpec((1, Tq, E), lambda b, i: (b, i, 0)),     # q tile (pre-scaled)
        pl.BlockSpec((1, L, E), lambda b, i: (b, 0, 0)),      # full K
        pl.BlockSpec((1, L, E), lambda b, i: (b, 0, 0)),      # full V
        _const_spec((E, E)),                                  # W_o^T
        _const_spec((1, E)),                                  # b_o
    ]
    out_shape = [jax.ShapeDtypeStruct((B, L, E), x.dtype)]
    out_specs = [pl.BlockSpec((1, Tq, E), lambda b, i: (b, i, 0))]
    scratch = [pltpu.VMEM((Tq, E), jnp.float32)]              # per-head context slab
    if return_attn_weights:
        out_shape.append(jax.ShapeDtypeStruct((B, L, L), attn_weights_dtype))
        out_specs.append(pl.BlockSpec((1, Tq, L), lambda b, i: (b, i, 0)))
        scratch.append(pltpu.VMEM((Tq, L), jnp.float32))      # head-summed attention weights

    flops = B * (4 * L * L * E + 2 * L * E * E)
    transc = B * num_heads * L * L
    bytes_acc = (4 * B * L * E) * isz + 2 * B * L * E * x.dtype.itemsize + E * E * isz
    if return_attn_weights:
        bytes_acc += B * L * L * jnp.dtype(attn_weights_dtype).itemsize

    res = pl.pallas_call(
        kernel,
        out_shape=tuple(out_shape),
        grid_spec=pltpu.PrefetchScalarGridSpec(
            num_scalar_prefetch=0,
            grid=(B, nq),
            in_specs=in_specs,
            out_specs=tuple(out_specs),
            scratch_shapes=scratch,
        ),
        compiler_params=pltpu.CompilerParams(
            dimension_semantics=("parallel", "parallel"), vmem_limit_bytes=budget),
        cost_estimate=pl.CostEstimate(flops=int(flops), transcendentals=int(transc),
                                      bytes_accessed=int(bytes_acc)),
    )(x, q, k, v, p["w_o_t"], p["b_o"])
    if return_attn_weights:
        return res[0], res[1]
    return res[0], None


# --------------------------------------------------------------------------- feed-forward kernel
def ffn_kernel(x_ref, g_ref, b_ref, w1_t_ref, b1_ref, w2_t_ref, b2_ref, out_ref,
               *, compute_dtype):
    x = x_ref[...].astype(jnp.float32)                        # (Tr, E)
    xn = _layer_norm(x, g_ref[...], b_ref[...])               # PreNorm (LN2)
    h = jnp.dot(xn.astype(compute_dtype), w1_t_ref[...],
                preferred_element_type=jnp.float32) + b1_ref[...]          # (Tr, H)
    h = _gelu_exact(h)
    y = jnp.dot(h.astype(compute_dtype), w2_t_ref[...],
                preferred_element_type=jnp.float32) + b2_ref[...]          # (Tr, E)
    out_ref[...] = (x + y).astype(out_ref.dtype)


def ffn_block(x, p):
    """y = x + Linear2(GELU(Linear1(LayerNorm(x)))), row-tiled over the flattened B*L axis."""
    B, L, E = x.shape
    H = p["w1_t"].shape[1]
    N = B * L
    compute_dtype = p["w1_t"].dtype
    isz = jnp.dtype(compute_dtype).itemsize
    budget = _vmem_budget_bytes()
    Tr = _row_tile(N, weight_bytes=2 * E * H * isz,
                   per_row_bytes=4 * E * 4 + 2 * H * isz + 3 * H * 4, budget=budget)
    x2d = x.reshape(N, E)

    kernel = partial(ffn_kernel, compute_dtype=compute_dtype)
    flops = 4 * N * E * H + 12 * N * H
    bytes_acc = 2 * N * E * x.dtype.itemsize + 2 * E * H * isz
    out2d = pl.pallas_call(
        kernel,
        out_shape=jax.ShapeDtypeStruct((N, E), x.dtype),
        grid_spec=pltpu.PrefetchScalarGridSpec(
            num_scalar_prefetch=0,
            grid=(N // Tr,),
            in_specs=[
                pl.BlockSpec((Tr, E), lambda i: (i, 0)),      # x rows
                _const_spec((1, E)),                          # LN2 gamma
                _const_spec((1, E)),                          # LN2 beta
                _const_spec((E, H)),                          # W1^T
                _const_spec((1, H)),                          # b1
                _const_spec((H, E)),                          # W2^T
                _const_spec((1, E)),                          # b2
            ],
            out_specs=pl.BlockSpec((Tr, E), lambda i: (i, 0)),
        ),
        compiler_params=pltpu.CompilerParams(
            dimension_semantics=("parallel",), vmem_limit_bytes=budget),
        cost_estimate=pl.CostEstimate(flops=int(flops), transcendentals=int(2 * N * H),
                                      bytes_accessed=int(bytes_acc)),
    )(x2d, p["ln2_g"], p["ln2_b"], p["w1_t"], p["b1"], p["w2_t"], p["b2"])
    return out2d.reshape(B, L, E)


# --------------------------------------------------------------------------- full encoder
def transformer_encoder_forward(x, prepared_layers, num_heads, return_attn_weights=True,
                                attn_weights_dtype=jnp.float32):
    """Equivalent of TransformerEncoder.forward: returns (x, [attention_weight per layer])."""
    # NOTE: real deployments should keep E, mlp_dim and L at multiples of 128 (pad in the
    # wrapper otherwise) so every block's last dim stays lane-dense.
    l_attn = []
    for p in prepared_layers:
        q, k, v = qkv_projection(x, p)
        x, w = attention_core(x, q, k, v, p, num_heads, return_attn_weights,
                              attn_weights_dtype)
        x = ffn_block(x, p)
        l_attn.append(w)
    # TODO(synk): dropout is 0.0 in this config; training-mode dropout RNG not implemented.
    return x, l_attn


# --------------------------------------------------------------------------- pure-JAX reference
def ref_encoder(x, layers, num_heads):
    def ln(t, g, b):
        mu = t.mean(-1, keepdims=True)
        var = ((t - mu) ** 2).mean(-1, keepdims=True)
        return (t - mu) / jnp.sqrt(var + LN_EPS) * g + b

    B, L, E = x.shape
    Dh = E // num_heads
    l_attn = []
    for lp in layers:
        xn = ln(x, lp["ln1_g"], lp["ln1_b"])
        qkv = xn @ lp["w_in"].T + lp["b_in"]
        q, k, v = jnp.split(qkv, 3, axis=-1)

        def heads(t):
            return t.reshape(B, L, num_heads, Dh).transpose(0, 2, 1, 3)

        qh, kh, vh = heads(q), heads(k), heads(v)
        s = jnp.einsum("bhld,bhmd->bhlm", qh, kh) / math.sqrt(Dh)
        p = jax.nn.softmax(s, axis=-1)
        ctx = jnp.einsum("bhlm,bhmd->bhld", p, vh).transpose(0, 2, 1, 3).reshape(B, L, E)
        x = ctx @ lp["w_o"].T + lp["b_o"] + x
        xn2 = ln(x, lp["ln2_g"], lp["ln2_b"])
        h = jax.nn.gelu(xn2 @ lp["w1"].T + lp["b1"], approximate=False)
        x = h @ lp["w2"].T + lp["b2"] + x
        l_attn.append(p.mean(axis=1))
    return x, l_attn


if __name__ == "__main__":
    B, L, E, HEADS, MLP, DEPTH = 2, 8, 32, 4, 64, 2

    key = jax.random.PRNGKey(0)
    kx, key = jax.random.split(key)
    x = jax.random.normal(kx, (B, L, E), dtype=jnp.float32)

    layers = []
    for _ in range(DEPTH):
        key, k1, k2, k3, k4, k5 = jax.random.split(key, 6)
        layers.append(dict(
            ln1_g=jnp.ones((E,), jnp.float32), ln1_b=jnp.zeros((E,), jnp.float32),
            w_in=jax.random.normal(k1, (3 * E, E), jnp.float32) / math.sqrt(E),
            b_in=jax.random.normal(k2, (3 * E,), jnp.float32) * 0.02,
            w_o=jax.random.normal(k3, (E, E), jnp.float32) / math.sqrt(E),
            b_o=jnp.zeros((E,), jnp.float32),
            ln2_g=jnp.ones((E,), jnp.float32), ln2_b=jnp.zeros((E,), jnp.float32),
            w1=jax.random.normal(k4, (MLP, E), jnp.float32) / math.sqrt(E),
            b1=jnp.zeros((MLP,), jnp.float32),
            w2=jax.random.normal(k5, (E, MLP), jnp.float32) / math.sqrt(MLP),
            b2=jnp.zeros((E,), jnp.float32),
        ))

    ref_out, ref_attn = ref_encoder(x, layers, HEADS)

    # f32 compute path: tight parity against the f32 reference.
    params_f32 = prepare_encoder_params(layers, HEADS, compute_dtype=jnp.float32)
    out, l_attn = transformer_encoder_forward(x, params_f32, HEADS)
    jax.block_until_ready((out, l_attn))
    assert jnp.allclose(out, ref_out, atol=1e-3, rtol=1e-3), "encoder output mismatch (f32)"
    for w, rw in zip(l_attn, ref_attn):
        assert jnp.allclose(w, rw, atol=1e-3, rtol=1e-3), "attention weight mismatch (f32)"

    # Default bf16 compute path (MXU throughput path, f32 accumulation): loose parity.
    params_bf16 = prepare_encoder_params(layers, HEADS)     # compute_dtype=bfloat16 default
    out_bf, attn_bf = transformer_encoder_forward(x, params_bf16, HEADS)
    jax.block_until_ready((out_bf, attn_bf))
    assert jnp.allclose(out_bf, ref_out, atol=2e-1, rtol=2e-1), "encoder output mismatch (bf16)"

    # Attention-weights-off path: drops the (L, L) buffers and wsum accumulation entirely.
    out_nw, _ = transformer_encoder_forward(x, params_bf16, HEADS, return_attn_weights=False)
    jax.block_until_ready(out_nw)
    assert jnp.allclose(out_nw, out_bf, atol=1e-3, rtol=1e-3), "weights-off path mismatch"

    print("KERNEL_OK")
</pallas_src>

<mosaic_0001>
module attributes {stable_mosaic.version = 11 : i64} {
  func.func @_probe_kernel(%arg0: i32, %arg1: memref<8x128xf32, #tpu.memory_space<vmem>>, %arg2: memref<8x128xf32, #tpu.memory_space<vmem>>) attributes {dimension_semantics = [#tpu.dimension_semantics<arbitrary>], iteration_bounds = array<i64: 2>, scalar_prefetch = 0 : i64, scratch_operands = 0 : i64, tpu.core_type = #tpu.core_type<tc>, window_params = [{pipeline_mode = #tpu.pipeline_mode<synchronous>, transform_indices = @transform_0, window_bounds = array<i64: 8, 128>}, {pipeline_mode = #tpu.pipeline_mode<synchronous>, transform_indices = @transform_1, window_bounds = array<i64: 8, 128>}]} {
    %c0 = arith.constant 0 : index
    %c0_0 = arith.constant 0 : index
    %0 = vector.load %arg1[%c0, %c0_0] : memref<8x128xf32, #tpu.memory_space<vmem>>, vector<8x128xf32>
    %cst = arith.constant 1.000000e+00 : f32
    %1 = vector.broadcast %cst : f32 to vector<8x128xf32>
    %2 = arith.addf %0, %1 : vector<8x128xf32>
    %c0_1 = arith.constant 0 : index
    %c0_2 = arith.constant 0 : index
    %3 = vector.load %arg2[%c0_1, %c0_2] : memref<8x128xf32, #tpu.memory_space<vmem>>, vector<8x128xf32>
    tpu.vector_store %arg2[%c0_1, %c0_2], %2 {strides = array<i32>} : memref<8x128xf32, #tpu.memory_space<vmem>>, vector<8x128xf32>,
    return
  }
  func.func @transform_0(%arg0: i32) -> (i32, i32) {
    %c0_i32 = arith.constant 0 : i32
    %c0_i32_0 = arith.constant 0 : i32
    %c0_i32_1 = arith.constant 0 : i32
    return %c0_i32, %c0_i32_0 : i32, i32
  }
  func.func @transform_1(%arg0: i32) -> (i32, i32) {
    %c0_i32 = arith.constant 0 : i32
    %c0_i32_0 = arith.constant 0 : i32
    %c0_i32_1 = arith.constant 0 : i32
    return %c0_i32, %c0_i32_0 : i32, i32
  }
}

module attributes {stable_mosaic.version = 11 : i64} {
  func.func @qkv_proj_kernel(%arg0: i32, %arg1: memref<16x32xf32, #tpu.memory_space<vmem>>, %arg2: memref<1x32xf32, #tpu.memory_space<vmem>>, %arg3: memref<1x32xf32, #tpu.memory_space<vmem>>, %arg4: memref<32x96xf32, #tpu.memory_space<vmem>>, %arg5: memref<1x96xf32, #tpu.memory_space<vmem>>, %arg6: memref<16x32xf32, #tpu.memory_space<vmem>>, %arg7: memref<16x32xf32, #tpu.memory_space<vmem>>, %arg8: memref<16x32xf32, #tpu.memory_space<vmem>>) attributes {dimension_semantics = [#tpu.dimension_semantics<parallel>], iteration_bounds = array<i64: 1>, scalar_prefetch = 0 : i64, scratch_operands = 0 : i64, tpu.core_type = #tpu.core_type<tc>, window_params = [{transform_indices = @transform_0, window_bounds = array<i64: 16, 32>}, {pipeline_mode = #tpu.pipeline_mode<synchronous>, transform_indices = @transform_1, window_bounds = array<i64: 1, 32>}, {pipeline_mode = #tpu.pipeline_mode<synchronous>, transform_indices = @transform_2, window_bounds = array<i64: 1, 32>}, {pipeline_mode = #tpu.pipeline_mode<synchronous>, transform_indices = @transform_3, window_bounds = array<i64: 32, 96>}, {pipeline_mode = #tpu.pipeline_mode<synchronous>, transform_indices = @transform_4, window_bounds = array<i64: 1, 96>}, {transform_indices = @transform_5, window_bounds = array<i64: 16, 32>}, {transform_indices = @transform_6, window_bounds = array<i64: 16, 32>}, {transform_indices = @transform_7, window_bounds = array<i64: 16, 32>}]} {
    %c0 = arith.constant 0 : index
    %c0_0 = arith.constant 0 : index
    %0 = vector.load %arg1[%c0, %c0_0] : memref<16x32xf32, #tpu.memory_space<vmem>>, vector<16x32xf32>
    %c0_1 = arith.constant 0 : index
    %c0_2 = arith.constant 0 : index
    %1 = vector.load %arg2[%c0_1, %c0_2] : memref<1x32xf32, #tpu.memory_space<vmem>>, vector<1x32xf32>
    %c0_3 = arith.constant 0 : index
    %c0_4 = arith.constant 0 : index
    %2 = vector.load %arg3[%c0_3, %c0_4] : memref<1x32xf32, #tpu.memory_space<vmem>>, vector<1x32xf32>
    %cst = arith.constant dense<0.000000e+00> : vector<16xf32>
    %3 = vector.multi_reduction <add>, %0, %cst [1] : vector<16x32xf32> to vector<16xf32>
    %4 = vector.shape_cast %3 : vector<16xf32> to vector<16x1xf32>
    %cst_5 = arith.constant 3.200000e+01 : f32
    %5 = vector.broadcast %cst_5 : f32 to vector<16x1xf32>
    %6 = arith.divf %4, %5 : vector<16x1xf32>
    %7 = vector.broadcast %6 : vector<16x1xf32> to vector<16x32xf32>
    %8 = arith.subf %0, %7 : vector<16x32xf32>
    %9 = arith.mulf %8, %8 : vector<16x32xf32>
    %cst_6 = arith.constant dense<0.000000e+00> : vector<16xf32>
    %10 = vector.multi_reduction <add>, %9, %cst_6 [1] : vector<16x32xf32> to vector<16xf32>
    %11 = vector.shape_cast %10 : vector<16xf32> to vector<16x1xf32>
    %cst_7 = arith.constant 3.200000e+01 : f32
    %12 = vector.broadcast %cst_7 : f32 to vector<16x1xf32>
    %13 = arith.divf %11, %12 : vector<16x1xf32>
    %cst_8 = arith.constant 9.99999974E-6 : f32
    %14 = vector.broadcast %cst_8 : f32 to vector<16x1xf32>
    %15 = arith.addf %13, %14 : vector<16x1xf32>
    %16 = math.rsqrt %15 : vector<16x1xf32>
    %17 = vector.broadcast %16 : vector<16x1xf32> to vector<16x32xf32>
    %18 = arith.mulf %8, %17 : vector<16x32xf32>
    %19 = vector.broadcast %1 : vector<1x32xf32> to vector<16x32xf32>
    %20 = arith.mulf %18, %19 : vector<16x32xf32>
    %21 = vector.broadcast %2 : vector<1x32xf32> to vector<16x32xf32>
    %22 = arith.addf %20, %21 : vector<16x32xf32>
    %c0_9 = arith.constant 0 : index
    %c0_10 = arith.constant 0 : index
    %23 = vector.load %arg4[%c0_9, %c0_10] : memref<32x96xf32, #tpu.memory_space<vmem>>, vector<32x96xf32>
    %cst_11 = arith.constant dense<0.000000e+00> : vector<16x96xf32>
    %24 = tpu.matmul %22, %23, %cst_11 {dimension_numbers = #tpu.dot_dimension_numbers<[1], [0], [0], [1], [0, 0, 1, 1], [], []>} : vector<16x32xf32>, vector<32x96xf32>, vector<16x96xf32> -> vector<16x96xf32>
    %c0_12 = arith.constant 0 : index
    %c0_13 = arith.constant 0 : index
    %25 = vector.load %arg5[%c0_12, %c0_13] : memref<1x96xf32, #tpu.memory_space<vmem>>, vector<1x96xf32>
    %26 = vector.broadcast %25 : vector<1x96xf32> to vector<16x96xf32>
    %27 = arith.addf %24, %26 : vector<16x96xf32>
    %28 = vector.extract_strided_slice %27 {offsets = [0, 0], sizes = [16, 32], strides = [1, 1]} : vector<16x96xf32> to vector<16x32xf32>
    %c0_14 = arith.constant 0 : index
    %c0_15 = arith.constant 0 : index
    %29 = vector.load %arg6[%c0_14, %c0_15] : memref<16x32xf32, #tpu.memory_space<vmem>>, vector<16x32xf32>
    tpu.vector_store %arg6[%c0_14, %c0_15], %28 {strides = array<i32>} : memref<16x32xf32, #tpu.memory_space<vmem>>, vector<16x32xf32>,
    %30 = vector.extract_strided_slice %27 {offsets = [0, 32], sizes = [16, 32], strides = [1, 1]} : vector<16x96xf32> to vector<16x32xf32>
    %c0_16 = arith.constant 0 : index
    %c0_17 = arith.constant 0 : index
    %31 = vector.load %arg7[%c0_16, %c0_17] : memref<16x32xf32, #tpu.memory_space<vmem>>, vector<16x32xf32>
    tpu.vector_store %arg7[%c0_16, %c0_17], %30 {strides = array<i32>} : memref<16x32xf32, #tpu.memory_space<vmem>>, vector<16x32xf32>,
    %32 = vector.extract_strided_slice %27 {offsets = [0, 64], sizes = [16, 32], strides = [1, 1]} : vector<16x96xf32> to vector<16x32xf32>
    %c0_18 = arith.constant 0 : index
    %c0_19 = arith.constant 0 : index
    %33 = vector.load %arg8[%c0_18, %c0_19] : memref<16x32xf32, #tpu.memory_space<vmem>>, vector<16x32xf32>
    tpu.vector_store %arg8[%c0_18, %c0_19], %32 {strides = array<i32>} : memref<16x32xf32, #tpu.memory_space<vmem>>, vector<16x32xf32>,
    return
  }
  func.func @transform_0(%arg0: i32) -> (i32, i32) {
    %c0_i32 = arith.constant 0 : i32
    %c0_i32_0 = arith.constant 0 : i32
    return %arg0, %c0_i32 : i32, i32
  }
  func.func @transform_1(%arg0: i32) -> (i32, i32) {
    %c0_i32 = arith.constant 0 : i32
    %c0_i32_0 = arith.constant 0 : i32
    %c0_i32_1 = arith.constant 0 : i32
    return %c0_i32, %c0_i32_0 : i32, i32
  }
  func.func @transform_2(%arg0: i32) -> (i32, i32) {
    %c0_i32 = arith.constant 0 : i32
    %c0_i32_0 = arith.constant 0 : i32
    %c0_i32_1 = arith.constant 0 : i32
    return %c0_i32, %c0_i32_0 : i32, i32
  }
  func.func @transform_3(%arg0: i32) -> (i32, i32) {
    %c0_i32 = arith.constant 0 : i32
    %c0_i32_0 = arith.constant 0 : i32
    %c0_i32_1 = arith.constant 0 : i32
    return %c0_i32, %c0_i32_0 : i32, i32
  }
  func.func @transform_4(%arg0: i32) -> (i32, i32) {
    %c0_i32 = arith.constant 0 : i32
    %c0_i32_0 = arith.constant 0 : i32
    %c0_i32_1 = arith.constant 0 : i32
    return %c0_i32, %c0_i32_0 : i32, i32
  }
  func.func @transform_5(%arg0: i32) -> (i32, i32) {
    %c0_i32 = arith.constant 0 : i32
    %c0_i32_0 = arith.constant 0 : i32
    return %arg0, %c0_i32 : i32, i32
  }
  func.func @transform_6(%arg0: i32) -> (i32, i32) {
    %c0_i32 = arith.constant 0 : i32
    %c0_i32_0 = arith.constant 0 : i32
    return %arg0, %c0_i32 : i32, i32
  }
  func.func @transform_7(%arg0: i32) -> (i32, i32) {
    %c0_i32 = arith.constant 0 : i32
    %c0_i32_0 = arith.constant 0 : i32
    return %arg0, %c0_i32 : i32, i32
  }
}

</mosaic_0001>

<llo_original>
// kernel: tpu_custom_call.1
$region0: #{tpu_custom_call.1}
  #allocation0 [shape = 'u32[]', space=smem, size = 0x4, offset = 0x4, fixed_abs, tag = 'smem constant byte address 0x4 - core index']
  #allocation1 [shape = 'u32[144,128]{1,0:T(1,128)}', space=vmem, size = 0x12000, scoped, tag = 'internal scratch']
  %s0 = inlined_call_operand.hbm [shape: f32[8,128], index: 0, kind: input, shape index: {}]
  %s1 = inlined_call_operand.hbm [shape: f32[8,128], index: 1, kind: output, shape index: {}]
  %s2 = sld [smem:[#allocation0]]
  $region41: #{tpu_custom_call.1} parent=0
    _
  %s4 = ssub.s32 1, %s2
  %s5 = scalar_select 0, %s4, %s2
  $region1: #{tpu_custom_call.1} parent=0
    #allocation2 [shape = 'u8[4096]{0}', space=vmem, size = 0x1000, scoped, tag = 'input window, operand 0, single buffered']
    #allocation3 [shape = 's32[2]{0}', space=sflag, size = 0x8, scoped, tag = 'scoped memory for tpu_custom_call.1']
    #allocation4 [shape = 's32[2]{0}', space=sflag, size = 0x8, scoped, tag = 'scoped memory for tpu_custom_call.1']
    #allocation5 [shape = 'u8[4096]{0}', space=vmem, size = 0x1000, scoped, tag = 'output window, operand 0, single buffered']
    %6 = vsyncpa [#allocation3], 0
    %7 = vsyncpa [#allocation4], 0
    loop: start=0, step=1, limit=4
    $region2: #{tpu_custom_call.1} parent=1 // loop_pre_header
      _
    $region3: #{tpu_custom_call.1} parent=1 // loop_header
      %s9 = sphi 0, %s13
      %p10 = scmp.ge.s32.totalorder %s9, 4
      %s17 = sphi 0, %s17
      %s19 = sphi 0, %s17
      %s20 = sphi 0, %s19
      %s34 = sphi 0, %s20
      %s38 = sphi 0, %s38
      %s40 = sphi 0, %s38
      %s41 = sphi 0, %s40
      %s55 = sphi 0, %s41
    $region4: #{tpu_custom_call.1} parent=1 // loop_header_branch
      %12 = sbr.rel (%p10) target = $region8
    $region5: #{tpu_custom_call.1} parent=1 // loop_body
      %s14 = ssub.s32 %s9, 1
      %s15 = ssub.s32 %s9, 2
      %s16 = sadd.s32 %s9, 1
      %s18 = sadd.s32 %s17, 1
      %p21 = scmp.eq.s32.totalorder %s9, 1
      %p22 = scmp.ne.s32.totalorder %s17, %s19
      %p23 = scmp.eq.s32.totalorder %s9, 0
      %p24 = por %p22, %p23
      %p25 = scmp.ne.s32.totalorder %s17, %s19
      %p26 = scmp.eq.s32.totalorder %s14, 1
      %p27 = por %p25, %p26
      %p28 = scmp.ne.s32.totalorder %s19, %s20
      %p29 = scmp.eq.s32.totalorder %s14, 0
      %p30 = por %p28, %p29
      %p31 = scmp.ne.s32.totalorder %s19, %s20
      %p32 = scmp.eq.s32.totalorder %s15, 1
      %p33 = por %p31, %p32
      %p35 = scmp.ne.s32.totalorder %s20, %s34
      %p36 = scmp.eq.s32.totalorder %s15, 0
      %p37 = por %p35, %p36
      %s39 = sadd.s32 %s38, 1
      %p42 = scmp.eq.s32.totalorder %s9, 1
      %p43 = scmp.ne.s32.totalorder %s38, %s40
      %p44 = scmp.eq.s32.totalorder %s9, 0
      %p45 = por %p43, %p44
      %p46 = scmp.ne.s32.totalorder %s38, %s40
      %p47 = scmp.eq.s32.totalorder %s14, 1
      %p48 = por %p46, %p47
      %p49 = scmp.ne.s32.totalorder %s40, %s41
      %p50 = scmp.eq.s32.totalorder %s14, 0
      %p51 = por %p49, %p50
      %p52 = scmp.ne.s32.totalorder %s40, %s41
      %p53 = scmp.eq.s32.totalorder %s15, 1
      %p54 = por %p52, %p53
      %p56 = scmp.ne.s32.totalorder %s41, %s55
      %p57 = scmp.eq.s32.totalorder %s15, 0
      %p58 = por %p56, %p57
      %p59 = scmp.le.s32.totalorder 1, %s9
      %p60 = scmp.lt.s32.totalorder %s9, 3
      %p61 = pnand %p59, %p60
      %p62 = pneg %p61
      // Predicated region
      $region9: #{tpu_custom_call.1} parent=5 // pred_check
        _
      $region10: #{tpu_custom_call.1} parent=5 // pred_check_branch
        %64 = sbr.rel (%p61) target = $region12
      $region11: #{tpu_custom_call.1} parent=5 // pred_region
        %s65 = ssub.s32 %s9, 1
        // Predicated region
        $region13: #{tpu_custom_call.1} parent=11 // pred_check
          %p66 = pneg %p30
        $region14: #{tpu_custom_call.1} parent=11 // pred_check_branch
          %68 = sbr.rel (%p66) target = $region16
        $region15: #{tpu_custom_call.1} parent=11 // pred_region
          %s70 = ssub.s32 128, 128
          %71 = vsyncadd [#allocation3], %s70
          %s73 = sshll.u32 [#allocation2], 4
          %s74 = int_to_ptr.vmem [resolvable:$true] %s73
          %76 = dma.hbm_to_vmem [thread:$0]  %s0, 128, %s74, [#allocation3]
        $region16: #{tpu_custom_call.1} parent=11 // pred_fallthru
          _
      $region12: #{tpu_custom_call.1} parent=5 // pred_fallthru
        _
      %p77 = scmp.lt.s32.totalorder %s9, 2
      // Predicated region
      $region17: #{tpu_custom_call.1} parent=5 // pred_check
        %p78 = pneg %p77
      $region18: #{tpu_custom_call.1} parent=5 // pred_check_branch
        %80 = sbr.rel (%p78) target = $region20
      $region19: #{tpu_custom_call.1} parent=5 // pred_region
        _
      $region20: #{tpu_custom_call.1} parent=5 // pred_fallthru
        _
      %p81 = scmp.le.s32.totalorder 1, %s9
      %p82 = scmp.lt.s32.totalorder %s9, 3
      %p83 = pnand %p81, %p82
      %p84 = pneg %p83
      // Predicated region
      $region21: #{tpu_custom_call.1} parent=5 // pred_check
        _
      $region22: #{tpu_custom_call.1} parent=5 // pred_check_branch
        %86 = sbr.rel (%p83) target = $region24
      $region23: #{tpu_custom_call.1} parent=5 // pred_region
        %s87 = ssub.s32 %s9, 1
        // Predicated region
        $region25: #{tpu_custom_call.1} parent=23 // pred_check
          %p88 = pneg %p30
        $region26: #{tpu_custom_call.1} parent=23 // pred_check_branch
          %90 = sbr.rel (%p88) target = $region28
        $region27: #{tpu_custom_call.1} parent=23 // pred_region
          %91 = dma.done [#allocation3], 128
        $region28: #{tpu_custom_call.1} parent=23 // pred_fallthru
          _
        %p92 = pneg %p30
        %p93 = pneg %p27
        %p94 = pneg %p51
        %p95 = pneg %p48
        %v96 = vld [vmem:[#allocation2] sm:$0xff]
        %v97 = vadd.f32 %v96, 1.0
        %98 = vst [vmem:[#allocation5] sm:$0xff] %v97
        // Predicated region
        $region29: #{tpu_custom_call.1} parent=23 // pred_check
          %p99 = pneg %p48
        $region30: #{tpu_custom_call.1} parent=23 // pred_check_branch
          %101 = sbr.rel (%p99) target = $region32
        $region31: #{tpu_custom_call.1} parent=23 // pred_region
          %s103 = ssub.s32 128, 128
          %104 = vsyncadd [#allocation4], %s103
          %s106 = sshll.u32 [#allocation5], 4
          %s107 = int_to_ptr.vmem [resolvable:$true] %s106
          %109 = dma.vmem_to_hbm [thread:$0]  %s107, 128, %s1, [#allocation4]
        $region32: #{tpu_custom_call.1} parent=23 // pred_fallthru
          _
        // Predicated region
        $region33: #{tpu_custom_call.1} parent=23 // pred_check
          %p110 = pneg %p48
        $region34: #{tpu_custom_call.1} parent=23 // pred_check_branch
          %112 = sbr.rel (%p110) target = $region36
        $region35: #{tpu_custom_call.1} parent=23 // pred_region
          %113 = dma.done [#allocation4], 128
        $region36: #{tpu_custom_call.1} parent=23 // pred_fallthru
          _
      $region24: #{tpu_custom_call.1} parent=5 // pred_fallthru
        _
      %p114 = scmp.le.s32.totalorder 2, %s9
      // Predicated region
      $region37: #{tpu_custom_call.1} parent=5 // pred_check
        %p115 = pneg %p114
      $region38: #{tpu_custom_call.1} parent=5 // pred_check_branch
        %117 = sbr.rel (%p115) target = $region40
      $region39: #{tpu_custom_call.1} parent=5 // pred_region
        %s118 = ssub.s32 %s9, 2
      $region40: #{tpu_custom_call.1} parent=5 // pred_fallthru
        _
    $region6: #{tpu_custom_call.1} parent=1 // loop_footer
      %s13 = sadd.s32 1, %s9
    $region7: #{tpu_custom_call.1} parent=1 // loop_footer_branch
      %8 = sbr.rel target = $region3
    $region8: #{tpu_custom_call.1} parent=1 // loop_exit
      _
    %119 = vsyncpa [#allocation3], 1
    %s120 = scalar_lea.sflag [#allocation3], 1
    %121 = vsyncpa %s120, 1
    %122 = vsyncpa [#allocation4], 1
    %s123 = scalar_lea.sflag [#allocation4], 1
    %124 = vsyncpa %s123, 1

// kernel: tpu_custom_call.1
$region0: #{tpu_custom_call.1}
  #allocation0 [shape = 'u32[]', space=smem, size = 0x4, offset = 0x4, fixed_abs, tag = 'smem constant byte address 0x4 - core index']
  #allocation1 [shape = 'u32[144,128]{1,0:T(1,128)}', space=vmem, size = 0x12000, scoped, tag = 'internal scratch']
  %s0 = inlined_call_operand.hbm [shape: f32[16,32], index: 0, kind: input, shape index: {}]
  %s1 = inlined_call_operand.vmem [shape: f32[1,32], index: 1, kind: input, shape index: {}]
  %s2 = inlined_call_operand.vmem [shape: f32[1,32], index: 2, kind: input, shape index: {}]
  %s3 = inlined_call_operand.hbm [shape: f32[32,96], index: 3, kind: input, shape index: {}]
  %s4 = inlined_call_operand.vmem [shape: f32[1,96], index: 4, kind: input, shape index: {}]
  %s5 = inlined_call_operand.hbm [shape: f32[16,32], index: 5, kind: output, shape index: {0}]
  %s6 = inlined_call_operand.hbm [shape: f32[16,32], index: 6, kind: output, shape index: {1}]
  %s7 = inlined_call_operand.hbm [shape: f32[16,32], index: 7, kind: output, shape index: {2}]
  %8 = xla_tuple %s5, %s6, %s7
  %s9 = sld [smem:[#allocation0]]
  $region54: #{tpu_custom_call.1} parent=0
    _
  %s11 = ssub.s32 1, %s9
  %s12 = scalar_select 0, %s11, %s9
  $region1: #{tpu_custom_call.1} parent=0
    #allocation2 [shape = 'u8[8192]{0}', space=vmem, size = 0x2000, scoped, tag = 'input window, operand 0, single buffered']
    #allocation3 [shape = 's32[1]{0}', space=sflag, size = 0x4, scoped, tag = 'scoped memory for tpu_custom_call.1']
    #allocation4 [shape = 's32[1]{0}', space=sflag, size = 0x4, scoped, tag = 'scoped memory for tpu_custom_call.1']
    #allocation5 [shape = 'u8[16384]{0}', space=vmem, size = 0x4000, scoped, tag = 'input window, operand 3, single buffered']
    #allocation6 [shape = 's32[1]{0}', space=sflag, size = 0x4, scoped, tag = 'scoped memory for tpu_custom_call.1']
    #allocation7 [shape = 'u8[8192]{0}', space=vmem, size = 0x2000, scoped, tag = 'output window, operand 0, single buffered']
    #allocation8 [shape = 'u8[8192]{0}', space=vmem, size = 0x2000, scoped, tag = 'output window, operand 1, single buffered']
    #allocation9 [shape = 's32[1]{0}', space=sflag, size = 0x4, scoped, tag = 'scoped memory for tpu_custom_call.1']
    #allocation10 [shape = 'u8[8192]{0}', space=vmem, size = 0x2000, scoped, tag = 'output window, operand 2, single buffered']
    %13 = vsyncpa [#allocation3], 0
    %14 = vsyncpa [#allocation6], 0
    %15 = vsyncpa [#allocation4], 0
    %16 = vsyncpa [#allocation9], 0
    // Predicated region
    $region2: #{tpu_custom_call.1} parent=1 // pred_check
      _
    $region3: #{tpu_custom_call.1} parent=1 // pred_check_branch
      %18 = sbr.rel (0) target = $region5
    $region4: #{tpu_custom_call.1} parent=1 // pred_region
      %s20 = ssub.s32 256, 256
      %21 = vsyncadd [#allocation3], %s20
      %s22 = sshll.u32 [#allocation2], 4
      %s23 = int_to_ptr.vmem [resolvable:$true] %s22
      %28 = dma.hbm_to_vmem [thread:$0]  %s0, 256, %s23, [#allocation3], 128, 128, 8
    $region5: #{tpu_custom_call.1} parent=1 // pred_fallthru
      _
    // Predicated region
    $region6: #{tpu_custom_call.1} parent=1 // pred_check
      _
    $region7: #{tpu_custom_call.1} parent=1 // pred_check_branch
      %30 = sbr.rel (0) target = $region9
    $region8: #{tpu_custom_call.1} parent=1 // pred_region
      _
    $region9: #{tpu_custom_call.1} parent=1 // pred_fallthru
      _
    // Predicated region
    $region10: #{tpu_custom_call.1} parent=1 // pred_check
      _
    $region11: #{tpu_custom_call.1} parent=1 // pred_check_branch
      %32 = sbr.rel (0) target = $region13
    $region12: #{tpu_custom_call.1} parent=1 // pred_region
      _
    $region13: #{tpu_custom_call.1} parent=1 // pred_fallthru
      _
    // Predicated region
    $region14: #{tpu_custom_call.1} parent=1 // pred_check
      _
    $region15: #{tpu_custom_call.1} parent=1 // pred_check_branch
      %34 = sbr.rel (0) target = $region17
    $region16: #{tpu_custom_call.1} parent=1 // pred_region
      %s36 = ssub.s32 512, 512
      %37 = vsyncadd [#allocation6], %s36
      %s38 = sshll.u32 [#allocation5], 4
      %s39 = int_to_ptr.vmem [resolvable:$true] %s38
      %44 = dma.hbm_to_vmem [thread:$0]  %s3, 512, %s39, [#allocation6], 128, 128, 8
    $region17: #{tpu_custom_call.1} parent=1 // pred_fallthru
      _
    // Predicated region
    $region18: #{tpu_custom_call.1} parent=1 // pred_check
      _
    $region19: #{tpu_custom_call.1} parent=1 // pred_check_branch
      %46 = sbr.rel (0) target = $region21
    $region20: #{tpu_custom_call.1} parent=1 // pred_region
      _
    $region21: #{tpu_custom_call.1} parent=1 // pred_fallthru
      _
    // Predicated region
    $region22: #{tpu_custom_call.1} parent=1 // pred_check
      _
    $region23: #{tpu_custom_call.1} parent=1 // pred_check_branch
      %48 = sbr.rel (0) target = $region25
    $region24: #{tpu_custom_call.1} parent=1 // pred_region
      %49 = dma.done [#allocation3], 256
    $region25: #{tpu_custom_call.1} parent=1 // pred_fallthru
      _
    // Predicated region
    $region26: #{tpu_custom_call.1} parent=1 // pred_check
      _
    $region27: #{tpu_custom_call.1} parent=1 // pred_check_branch
      %51 = sbr.rel (0) target = $region29
    $region28: #{tpu_custom_call.1} parent=1 // pred_region
      %52 = dma.done [#allocation6], 512
    $region29: #{tpu_custom_call.1} parent=1 // pred_fallthru
      _
    %v53 = vld [vmem:[#allocation2] sm:$0xff]
    %v54 = vld [vmem:[#allocation2 + $0x8] sm:$0xff]
    %v55 = vld [vmem:[%s1] sm:$0x1]
    %v56 = vld [vmem:[%s2] sm:$0x1]
    %vm57 = vcmask 261120
    %v58 = vsel %vm57, %v53, 0.0
    %59 = vadd.xlane.f32.xlu0 %v58
    %v60 = vpop.xlane.xlu0 %59
    %v61 = vsel %vm57, %v54, 0.0
    %62 = vadd.xlane.f32.xlu0 %v61
    %v63 = vpop.xlane.xlu0 %62
    %v64 = vrcp.pop 32.0
    %v65 = vmul.f32 %v60, %v64
    %v66 = vmul.f32 %v63, %v64
    %v67 = vsub.f32 %v53, %v65
    %v68 = vsub.f32 %v54, %v66
    %v69 = vmul.f32 %v67, %v67
    %v70 = vmul.f32 %v68, %v68
    %v71 = vsel %vm57, %v69, 0.0
    %72 = vadd.xlane.f32.xlu0 %v71
    %v73 = vpop.xlane.xlu0 %72
    %v74 = vsel %vm57, %v70, 0.0
    %75 = vadd.xlane.f32.xlu0 %v74
    %v76 = vpop.xlane.xlu0 %75
    %v77 = vmul.f32 %v73, %v64
    %v78 = vmul.f32 %v76, %v64
    %v79 = vadd.f32 %v77, 1e-05
    %v80 = vadd.f32 %v78, 1e-05
    %v81 = vrsqrt.pop %v79
    %v82 = vrsqrt.pop %v80
    %v83 = vmul.f32 %v67, %v81
    %v84 = vmul.f32 %v68, %v82
    %v86 = vlaneseq
    %v87 = vshrl.u32 %v86, 7
    %v88 = vsub.s32 0, %v87
    %v89 = vrot.slane %v55, %v88
    %v91 = vmul.f32 %v83, %v89
    %v92 = vmul.f32 %v84, %v89
    %v94 = vlaneseq
    %v95 = vshrl.u32 %v94, 7
    %v96 = vsub.s32 0, %v95
    %v97 = vrot.slane %v56, %v96
    %v99 = vadd.f32 %v91, %v97
    %v100 = vadd.f32 %v92, %v97
    %v101 = vld [vmem:[#allocation5] sm:$0xff]
    %v102 = vld [vmem:[#allocation5 + $0x8] sm:$0xff]
    %v103 = vld [vmem:[#allocation5 + $0x10] sm:$0xff]
    %v104 = vld [vmem:[#allocation5 + $0x18] sm:$0xff]
    %v105 = vld [vmem:[%s4] sm:$0x1]
    %v107 = vlaneseq
    %v108 = vshrl.u32 %v107, 7
    %v109 = vsub.s32 0, %v108
    %v110 = vrot.slane %v105, %v109
    %v113 = vsel %vm57, %v99, 0
    %v116 = vsel %vm57, %v100, 0
    %118 = vmatprep.subr.mxu0 0.0
    %119 = vmatpush1.msra.mxu0 %v101
    %120 = vmatprep.subr.mxu0 0.0
    %121 = vmatpush1.msra.mxu0 %v102
    %122 = vmatprep.subr.mxu0 0.0
    %123 = vmatpush1.msra.mxu0 %v103
    %124 = vmatprep.subr.mxu0 0.0
    %125 = vmatpush1.msra.mxu0 %v104
    %126 = vmatprep.subr.mxu0 0.0
    %127 = vmatpush1.msra.mxu0 0.0
    %128 = vmatprep.subr.mxu0 0.0
    %129 = vmatpush1.msra.mxu0 0.0
    %130 = vmatprep.subr.mxu0 0.0
    %131 = vmatpush1.msra.mxu0 0.0
    %132 = vmatprep.subr.mxu0 0.0
    %133 = vmatpush1.msra.mxu0 0.0
    %134 = vmatprep.subr.mxu0 0.0
    %135 = vmatpush1.msra.mxu0 0.0
    %136 = vmatprep.subr.mxu0 0.0
    %137 = vmatpush1.msra.mxu0 0.0
    %138 = vmatprep.subr.mxu0 0.0
    %139 = vmatpush1.msra.mxu0 0.0
    %140 = vmatprep.subr.mxu0 0.0
    %141 = vmatpush1.msra.mxu0 0.0
    %142 = vmatprep.subr.mxu0 0.0
    %143 = vmatpush1.msra.mxu0 0.0
    %144 = vmatprep.subr.mxu0 0.0
    %145 = vmatpush1.msra.mxu0 0.0
    %146 = vmatprep.subr.mxu0 0.0
    %147 = vmatpush1.msra.mxu0 0.0
    %148 = vmatprep.subr.mxu0 0.0
    %149 = vmatpush1.msra.mxu0 0.0
    %150 = vmatprep.subr.mxu0 0.0
    %151 = vmatpush1.msra.mxu0 0.0
    %152 = vmatprep.subr.mxu0 0.0
    %153 = vmatpush1.msra.mxu0 0.0
    %154 = vmatprep.subr.mxu0 0.0
    %155 = vmatpush1.msra.mxu0 0.0
    %156 = vmatprep.subr.mxu0 0.0
    %157 = vmatpush1.msra.mxu0 0.0
    %158 = vmatprep.subr.mxu0 0.0
    %159 = vmatpush1.msra.mxu0 0.0
    %160 = vmatprep.subr.mxu0 0.0
    %161 = vmatpush1.msra.mxu0 0.0
    %162 = vmatprep.subr.mxu0 0.0
    %163 = vmatpush1.msra.mxu0 0.0
    %164 = vmatprep.subr.mxu0 0.0
    %165 = vmatpush1.msra.mxu0 0.0
    %166 = vmatprep.subr.mxu0 0.0
    %167 = vmatpush1.msra.mxu0 0.0
    %168 = vmatprep.subr.mxu0 0.0
    %169 = vmatpush1.msra.mxu0 0.0
    %170 = vmatprep.subr.mxu0 0.0
    %171 = vmatpush1.msra.mxu0 0.0
    %172 = vmatprep.subr.mxu0 0.0
    %173 = vmatpush1.msra.mxu0 0.0
    %174 = vmatprep.subr.mxu0 0.0
    %175 = vmatpush1.msra.mxu0 0.0
    %176 = vmatprep.subr.mxu0 0.0
    %177 = vmatpush1.msra.mxu0 0.0
    %178 = vmatprep.subr.mxu0 0.0
    %179 = vmatpush1.msra.mxu0 0.0
    %180 = vmatprep.subr.mxu0 0.0
    %181 = vmatpush1.msra.mxu0 0.0
    %182 = vmatprep.mubr.f32.mxu0 0.0
    %183 = vmatmul.mubr.f32.gmra.mrb[0].mxu0 %v113
    %v184 = vpop.f32.mrb[0].mxu0
    %v185 = vadd.f32 %v110, %v184
    %v186 = vpop.f32.mrb[0].mxu0
    %187 = vmatprep.mubr.f32.mxu0 0.0
    %188 = vmatmul.mubr.f32.gmra.mrb[0].mxu0 %v116
    %v189 = vpop.f32.mrb[0].mxu0
    %v190 = vadd.f32 %v110, %v189
    %v191 = vpop.f32.mrb[0].mxu0
    %192 = vdwg.mxu0
    %193 = vst.msk [vmem:[#allocation7] sm:$0xff] %vm57, %v185
    %194 = vst.msk [vmem:[#allocation7 + $0x8] sm:$0xff] %vm57, %v190
    %197 = vrot.lane.b32.xlu0 %v185, 96
    %v198 = vpop.permute.xlu0 %197
    %199 = vrot.lane.b32.xlu0 %v190, 96
    %v200 = vpop.permute.xlu0 %199
    %203 = vst.msk [vmem:[#allocation8] sm:$0xff] %vm57, %v198
    %204 = vst.msk [vmem:[#allocation8 + $0x8] sm:$0xff] %vm57, %v200
    %205 = vrot.lane.b32.xlu0 %v185, 64
    %v206 = vpop.permute.xlu0 %205
    %207 = vrot.lane.b32.xlu0 %v190, 64
    %v208 = vpop.permute.xlu0 %207
    %211 = vst.msk [vmem:[#allocation10] sm:$0xff] %vm57, %v206
    %212 = vst.msk [vmem:[#allocation10 + $0x8] sm:$0xff] %vm57, %v208
    // Predicated region
    $region30: #{tpu_custom_call.1} parent=1 // pred_check
      _
    $region31: #{tpu_custom_call.1} parent=1 // pred_check_branch
      %214 = sbr.rel (0) target = $region33
    $region32: #{tpu_custom_call.1} parent=1 // pred_region
      %s216 = ssub.s32 256, 256
      %217 = vsyncadd [#allocation4], %s216
      %s218 = sshll.u32 [#allocation7], 4
      %s219 = int_to_ptr.vmem [resolvable:$true] %s218
      %224 = dma.vmem_to_hbm [thread:$0]  %s219, 256, %s5, [#allocation4], 128, 128, 8
    $region33: #{tpu_custom_call.1} parent=1 // pred_fallthru
      _
    // Predicated region
    $region34: #{tpu_custom_call.1} parent=1 // pred_check
      _
    $region35: #{tpu_custom_call.1} parent=1 // pred_check_branch
      %226 = sbr.rel (0) target = $region37
    $region36: #{tpu_custom_call.1} parent=1 // pred_region
      %s228 = ssub.s32 256, 256
      %229 = vsyncadd [#allocation9], %s228
      %s230 = sshll.u32 [#allocation8], 4
      %s231 = int_to_ptr.vmem [resolvable:$true] %s230
      %236 = dma.vmem_to_hbm [thread:$0]  %s231, 256, %s6, [#allocation9], 128, 128, 8
    $region37: #{tpu_custom_call.1} parent=1 // pred_fallthru
      _
    // Predicated region
    $region38: #{tpu_custom_call.1} parent=1 // pred_check
      _
    $region39: #{tpu_custom_call.1} parent=1 // pred_check_branch
      %238 = sbr.rel (0) target = $region41
    $region40: #{tpu_custom_call.1} parent=1 // pred_region
      %s240 = ssub.s32 256, 256
      %241 = vsyncadd [#allocation9], %s240
      %s242 = sshll.u32 [#allocation10], 4
      %s243 = int_to_ptr.vmem [resolvable:$true] %s242
      %248 = dma.vmem_to_hbm [thread:$0]  %s243, 256, %s7, [#allocation9], 128, 128, 8
    $region41: #{tpu_custom_call.1} parent=1 // pred_fallthru
      _
    // Predicated region
    $region42: #{tpu_custom_call.1} parent=1 // pred_check
      _
    $region43: #{tpu_custom_call.1} parent=1 // pred_check_branch
      %250 = sbr.rel (0) target = $region45
    $region44: #{tpu_custom_call.1} parent=1 // pred_region
      %251 = dma.done [#allocation4], 256
    $region45: #{tpu_custom_call.1} parent=1 // pred_fallthru
      _
    // Predicated region
    $region46: #{tpu_custom_call.1} parent=1 // pred_check
      _
    $region47: #{tpu_custom_call.1} parent=1 // pred_check_branch
      %253 = sbr.rel (0) target = $region49
    $region48: #{tpu_custom_call.1} parent=1 // pred_region
      %254 = dma.done [#allocation9], 256
    $region49: #{tpu_custom_call.1} parent=1 // pred_fallthru
      _
    // Predicated region
    $region50: #{tpu_custom_call.1} parent=1 // pred_check
      _
    $region51: #{tpu_custom_call.1} parent=1 // pred_check_branch
      %256 = sbr.rel (0) target = $region53
    $region52: #{tpu_custom_call.1} parent=1 // pred_region
      %257 = dma.done [#allocation9], 256
    $region53: #{tpu_custom_call.1} parent=1 // pred_fallthru
      _
    %258 = vsyncpa [#allocation3], 1
    %259 = vsyncpa [#allocation6], 1
    %260 = vsyncpa [#allocation4], 1
    %261 = vsyncpa [#allocation9], 1

</llo_original>
